<compile_context>
chip_gen: v6e
topology: v6e:2x2x1
jax: 0.10.0
libtpu: 0.0.40
codegen_flags: <defaults>
</compile_context>

<pallas_src>
import functools

import jax
import jax.numpy as jnp
import numpy as np
from jax import lax
from jax.experimental import pallas as pl
from jax.experimental.pallas import tpu as pltpu

EPSILON = 1e-10            # matches EPISILON in the PyTorch module
NORM_EPS = 1e-12           # torch.nn.functional.normalize default eps
_NEG_LOG_EPS = 23.025850929940457   # -log(EPSILON), clamp for the log-softmax path


def _nce_rowblock_kernel(f1_ref, f2_ref, trow_ref, tcol_ref, out_ref, *,
                         inv_temperature, d, mxu_dtype):
    f1 = f1_ref[...]        # (TM, D) f32 query-row block
    f2 = f2_ref[...]        # (N, D)  f32, resident across the grid
    t_row = trow_ref[...]   # (TM, 1) targets for this row block
    t_col = tcol_ref[...]   # (1, N)  lane-major targets (no in-kernel transpose)

    # F.normalize(x, dim=1) = x / max(||x||, eps) = x * rsqrt(max(||x||^2, eps^2))
    inv_n1 = lax.rsqrt(jnp.maximum(jnp.sum(f1 * f1, axis=1, keepdims=True),
                                   NORM_EPS * NORM_EPS))
    inv_n2 = lax.rsqrt(jnp.maximum(jnp.sum(f2 * f2, axis=1, keepdims=True),
                                   NORM_EPS * NORM_EPS))
    f1n = f1 * inv_n1
    f2n = f2 * inv_n2

    # cos = 1 - 0.5 * ||f1n_i - f2n_j||^2 == <f1n_i, f2n_j> for unit-norm rows.
    sim = lax.dot_general(
        f1n.astype(mxu_dtype), f2n.astype(mxu_dtype),
        dimension_numbers=(((1,), (1,)), ((), ())),
        preferred_element_type=jnp.float32)               # (TM, N)

    # --- self_mask (d is a static Python float, so this branch is static) ---
    if d > 0:
        mask_distance = jnp.abs(t_row - t_col) > d        # (TM, N)
        pol_r = (t_row < 0).astype(jnp.float32)
        pol_c = (t_col < 0).astype(jnp.float32)
        mask_polarity = jnp.abs(pol_r - pol_c) > 0.0
        self_mask = jnp.logical_or(mask_distance, mask_polarity).astype(jnp.float32)
    else:
        self_mask = ((t_row - t_col) != 0.0).astype(jnp.float32)

    # --- softmax over keys (axis=1), shared shift for stability ---
    logits = sim * inv_temperature
    z = logits - jnp.max(logits, axis=1, keepdims=True)
    e = jnp.exp(z)
    denom = jnp.sum(e, axis=1, keepdims=True)             # (TM, 1)
    p = e * pl.reciprocal(denom, approx=True)

    # -log(softmax + EPS) ~= min(log(denom) - z, -log(EPS)) : one log per row,
    # clamped so extremely small p behaves like the reference's +EPS floor.
    neg_log_p = jnp.minimum(jnp.log(denom) - z, _NEG_LOG_EPS)
    log_pos = neg_log_p * (1.0 - self_mask)
    log_neg = -jnp.log(1.0 - p + EPSILON) * self_mask

    pos_cnt = jnp.sum(1.0 - self_mask, axis=1, keepdims=True)
    neg_cnt = jnp.sum(self_mask, axis=1, keepdims=True)
    per_row = (jnp.sum(log_pos, axis=1, keepdims=True) * pl.reciprocal(pos_cnt, approx=True)
               + jnp.sum(log_neg, axis=1, keepdims=True) * pl.reciprocal(neg_cnt, approx=True))

    out_ref[...] = per_row                                # (TM, 1)


def _pick_block_rows(n):
    """Largest sublane-aligned row tile dividing n whose (TM,N) temporaries fit."""
    temp_budget = 24 << 20   # bytes for ~12 live (TM, N) f32 temporaries
    for tm in (512, 256, 128, 64, 32, 16, 8):
        if n % tm == 0 and 12 * tm * n * 4 <= temp_budget:
            return tm
    return n                 # single full-extent block


def nce_loss(f1, f2, targets, temperature=1.0, d=0.1,
             mxu_dtype=jnp.bfloat16, block_rows=None):
    """Pallas TPU implementation of NCELoss.forward."""
    n, d_feat = f1.shape
    f1 = f1.astype(jnp.float32)
    f2 = f2.astype(jnp.float32)
    t_row = targets.reshape(n, 1).astype(jnp.float32)
    t_col = targets.reshape(1, n).astype(jnp.float32)     # lane-major copy

    tm = block_rows if block_rows is not None else _pick_block_rows(n)
    assert n % tm == 0, "block_rows must divide N"
    grid = (n // tm,)

    # VMEM budget estimate: resident f2/t_col + double-buffered blocks + temporaries.
    vmem_need = (2 * (n * d_feat + n) * 4
                 + 2 * (tm * d_feat + tm) * 4
                 + 2 * tm * 4
                 + 12 * tm * n * 4)
    vmem_limit = int(min(max(2 * vmem_need, 32 << 20), 48 << 20))  # 48 MiB cap (v7x safe)

    kernel = functools.partial(
        _nce_rowblock_kernel,
        inv_temperature=float(1.0 / temperature),
        d=float(d),
        mxu_dtype=mxu_dtype,
    )

    per_row = pl.pallas_call(
        kernel,
        out_shape=jax.ShapeDtypeStruct((n, 1), jnp.float32),
        grid_spec=pltpu.PrefetchScalarGridSpec(
            num_scalar_prefetch=0,
            grid=grid,
            in_specs=[
                pl.BlockSpec((tm, d_feat), lambda i: (i, 0)),  # f1 row block
                pl.BlockSpec((n, d_feat), lambda i: (0, 0)),   # f2 resident
                pl.BlockSpec((tm, 1), lambda i: (i, 0)),       # targets (row layout)
                pl.BlockSpec((1, n), lambda i: (0, 0)),        # targets (lane layout)
            ],
            out_specs=pl.BlockSpec((tm, 1), lambda i: (i, 0)),
        ),
        compiler_params=pltpu.CompilerParams(
            dimension_semantics=("parallel",),
            vmem_limit_bytes=vmem_limit),
    )(f1, f2, t_row, t_col)

    return jnp.mean(per_row)


def nce_loss_ref(f1, f2, targets, temperature=1.0, d=0.1):
    """Pure-JAX reference mirroring the PyTorch module (for verification)."""
    f1 = f1.astype(jnp.float32)
    f2 = f2.astype(jnp.float32)
    t = targets.astype(jnp.float32)
    f1n = f1 / jnp.maximum(jnp.linalg.norm(f1, axis=1, keepdims=True), NORM_EPS)
    f2n = f2 / jnp.maximum(jnp.linalg.norm(f2, axis=1, keepdims=True), NORM_EPS)
    if d > 0:
        dist_t = jnp.abs(t[:, None] - t[None, :])
        mask_distance = dist_t > d
        pol = (t < 0).astype(jnp.int32)
        mask_polarity = jnp.abs(pol[:, None] - pol[None, :]) != 0
        self_mask = jnp.logical_or(mask_distance, mask_polarity).astype(jnp.float32)
    else:
        self_mask = ((t[:, None] - t[None, :]) != 0).astype(jnp.float32)
    dist = jnp.sum((f1n[:, None, :] - f2n[None, :, :]) ** 2, axis=2)
    cos = 1.0 - 0.5 * dist
    p = jax.nn.softmax(cos / temperature, axis=1)
    log_pos = -jnp.log(p + EPSILON) * (1.0 - self_mask)
    log_neg = -jnp.log(1.0 - p + EPSILON) * self_mask
    per_row = jnp.sum(log_pos, axis=1) / jnp.sum(1.0 - self_mask, axis=1) + \
              jnp.sum(log_neg, axis=1) / jnp.sum(self_mask, axis=1)
    return jnp.mean(per_row)


if __name__ == "__main__":
    N, D = 32, 32
    key = jax.random.PRNGKey(0)
    k1, k2, k3 = jax.random.split(key, 3)
    f1 = jax.random.normal(k1, (N, D), dtype=jnp.float32)
    f2 = jax.random.normal(k2, (N, D), dtype=jnp.float32)
    # targets spread over [-1, 1] so both mask branches get populated
    targets = jax.random.uniform(k3, (N,), dtype=jnp.float32, minval=-1.0, maxval=1.0)

    # block_rows=8 -> grid of 4 row blocks, exercising the tiled/parallel path.
    loss = nce_loss(f1, f2, targets, temperature=1.0, d=0.1, block_rows=8)
    loss = jax.block_until_ready(loss)

    loss_ref = jax.block_until_ready(nce_loss_ref(f1, f2, targets, 1.0, 0.1))
    # Tolerance accounts for bf16 MXU operands + approx EUP reciprocals.
    np.testing.assert_allclose(np.asarray(loss), np.asarray(loss_ref),
                               rtol=5e-3, atol=5e-3)
    print("KERNEL_OK")
</pallas_src>

<mosaic_0001>
module attributes {stable_mosaic.version = 11 : i64} {
  func.func @_nce_rowblock_kernel(%arg0: i32, %arg1: memref<8x32xf32, #tpu.memory_space<vmem>>, %arg2: memref<32x32xf32, #tpu.memory_space<vmem>>, %arg3: memref<8x1xf32, #tpu.memory_space<vmem>>, %arg4: memref<1x32xf32, #tpu.memory_space<vmem>>, %arg5: memref<8x1xf32, #tpu.memory_space<vmem>>) attributes {dimension_semantics = [#tpu.dimension_semantics<parallel>], iteration_bounds = array<i64: 4>, scalar_prefetch = 0 : i64, scratch_operands = 0 : i64, tpu.core_type = #tpu.core_type<tc>, window_params = [{transform_indices = @transform_0, window_bounds = array<i64: 8, 32>}, {pipeline_mode = #tpu.pipeline_mode<synchronous>, transform_indices = @transform_1, window_bounds = array<i64: 32, 32>}, {transform_indices = @transform_2, window_bounds = array<i64: 8, 1>}, {pipeline_mode = #tpu.pipeline_mode<synchronous>, transform_indices = @transform_3, window_bounds = array<i64: 1, 32>}, {transform_indices = @transform_4, window_bounds = array<i64: 8, 1>}]} {
    %c0 = arith.constant 0 : index
    %c0_0 = arith.constant 0 : index
    %0 = vector.load %arg1[%c0, %c0_0] : memref<8x32xf32, #tpu.memory_space<vmem>>, vector<8x32xf32>
    %c0_1 = arith.constant 0 : index
    %c0_2 = arith.constant 0 : index
    %1 = vector.load %arg2[%c0_1, %c0_2] : memref<32x32xf32, #tpu.memory_space<vmem>>, vector<32x32xf32>
    %c0_3 = arith.constant 0 : index
    %c0_4 = arith.constant 0 : index
    %2 = vector.load %arg3[%c0_3, %c0_4] : memref<8x1xf32, #tpu.memory_space<vmem>>, vector<8x1xf32>
    %c0_5 = arith.constant 0 : index
    %c0_6 = arith.constant 0 : index
    %3 = vector.load %arg4[%c0_5, %c0_6] : memref<1x32xf32, #tpu.memory_space<vmem>>, vector<1x32xf32>
    %4 = arith.mulf %0, %0 : vector<8x32xf32>
    %cst = arith.constant dense<0.000000e+00> : vector<8xf32>
    %5 = vector.multi_reduction <add>, %4, %cst [1] : vector<8x32xf32> to vector<8xf32>
    %6 = vector.shape_cast %5 : vector<8xf32> to vector<8x1xf32>
    %cst_7 = arith.constant 1.000000e-24 : f32
    %7 = vector.broadcast %cst_7 : f32 to vector<8x1xf32>
    %8 = arith.maximumf %6, %7 : vector<8x1xf32>
    %9 = math.rsqrt %8 : vector<8x1xf32>
    %10 = arith.mulf %1, %1 : vector<32x32xf32>
    %cst_8 = arith.constant dense<0.000000e+00> : vector<32xf32>
    %11 = vector.multi_reduction <add>, %10, %cst_8 [1] : vector<32x32xf32> to vector<32xf32>
    %12 = vector.shape_cast %11 : vector<32xf32> to vector<32x1xf32>
    %cst_9 = arith.constant 1.000000e-24 : f32
    %13 = vector.broadcast %cst_9 : f32 to vector<32x1xf32>
    %14 = arith.maximumf %12, %13 : vector<32x1xf32>
    %15 = math.rsqrt %14 : vector<32x1xf32>
    %16 = vector.broadcast %9 : vector<8x1xf32> to vector<8x32xf32>
    %17 = arith.mulf %0, %16 : vector<8x32xf32>
    %18 = vector.broadcast %15 : vector<32x1xf32> to vector<32x32xf32>
    %19 = arith.mulf %1, %18 : vector<32x32xf32>
    %20 = arith.truncf %17 : vector<8x32xf32> to vector<8x32xbf16>
    %21 = arith.truncf %19 : vector<32x32xf32> to vector<32x32xbf16>
    %cst_10 = arith.constant dense<0.000000e+00> : vector<8x32xf32>
    %22 = tpu.matmul %20, %21, %cst_10 {dimension_numbers = #tpu.dot_dimension_numbers<[1], [1], [0], [0], [0, 0, 1, 0], [], []>} : vector<8x32xbf16>, vector<32x32xbf16>, vector<8x32xf32> -> vector<8x32xf32>
    %23 = vector.broadcast %2 : vector<8x1xf32> to vector<8x32xf32>
    %24 = vector.broadcast %3 : vector<1x32xf32> to vector<8x32xf32>
    %25 = arith.subf %23, %24 : vector<8x32xf32>
    %26 = math.absf %25 : vector<8x32xf32>
    %cst_11 = arith.constant 1.000000e-01 : f32
    %27 = vector.broadcast %cst_11 : f32 to vector<8x32xf32>
    %28 = arith.cmpf ogt, %26, %27 : vector<8x32xf32>
    %cst_12 = arith.constant 0.000000e+00 : f32
    %29 = vector.broadcast %cst_12 : f32 to vector<8x1xf32>
    %30 = arith.cmpf olt, %2, %29 : vector<8x1xf32>
    %31 = arith.extui %30 : vector<8x1xi1> to vector<8x1xi32>
    %32 = arith.sitofp %31 : vector<8x1xi32> to vector<8x1xf32>
    %cst_13 = arith.constant 0.000000e+00 : f32
    %33 = vector.broadcast %cst_13 : f32 to vector<1x32xf32>
    %34 = arith.cmpf olt, %3, %33 : vector<1x32xf32>
    %35 = arith.extui %34 : vector<1x32xi1> to vector<1x32xi32>
    %36 = arith.sitofp %35 : vector<1x32xi32> to vector<1x32xf32>
    %37 = vector.broadcast %32 : vector<8x1xf32> to vector<8x32xf32>
    %38 = vector.broadcast %36 : vector<1x32xf32> to vector<8x32xf32>
    %39 = arith.subf %37, %38 : vector<8x32xf32>
    %40 = math.absf %39 : vector<8x32xf32>
    %cst_14 = arith.constant 0.000000e+00 : f32
    %41 = vector.broadcast %cst_14 : f32 to vector<8x32xf32>
    %42 = arith.cmpf ogt, %40, %41 : vector<8x32xf32>
    %43 = arith.ori %28, %42 : vector<8x32xi1>
    %44 = arith.extui %43 : vector<8x32xi1> to vector<8x32xi32>
    %45 = arith.sitofp %44 : vector<8x32xi32> to vector<8x32xf32>
    %cst_15 = arith.constant 1.000000e+00 : f32
    %46 = vector.broadcast %cst_15 : f32 to vector<8x32xf32>
    %47 = arith.mulf %22, %46 : vector<8x32xf32>
    %cst_16 = arith.constant dense<0xFF800000> : vector<8xf32>
    %48 = vector.multi_reduction <maximumf>, %47, %cst_16 [1] : vector<8x32xf32> to vector<8xf32>
    %49 = vector.shape_cast %48 : vector<8xf32> to vector<8x1xf32>
    %50 = vector.broadcast %49 : vector<8x1xf32> to vector<8x32xf32>
    %51 = arith.subf %47, %50 : vector<8x32xf32>
    %52 = math.exp %51 : vector<8x32xf32>
    %cst_17 = arith.constant dense<0.000000e+00> : vector<8xf32>
    %53 = vector.multi_reduction <add>, %52, %cst_17 [1] : vector<8x32xf32> to vector<8xf32>
    %54 = vector.shape_cast %53 : vector<8xf32> to vector<8x1xf32>
    %55 = tpu.reciprocal %54 {approx = true} : vector<8x1xf32> -> vector<8x1xf32>
    %56 = vector.broadcast %55 : vector<8x1xf32> to vector<8x32xf32>
    %57 = arith.mulf %52, %56 : vector<8x32xf32>
    %58 = math.log %54 : vector<8x1xf32>
    %59 = vector.broadcast %58 : vector<8x1xf32> to vector<8x32xf32>
    %60 = arith.subf %59, %51 : vector<8x32xf32>
    %cst_18 = arith.constant 23.0258503 : f32
    %61 = vector.broadcast %cst_18 : f32 to vector<8x32xf32>
    %62 = arith.minimumf %60, %61 : vector<8x32xf32>
    %cst_19 = arith.constant 1.000000e+00 : f32
    %63 = vector.broadcast %cst_19 : f32 to vector<8x32xf32>
    %64 = arith.subf %63, %45 : vector<8x32xf32>
    %65 = arith.mulf %62, %64 : vector<8x32xf32>
    %cst_20 = arith.constant 1.000000e+00 : f32
    %66 = vector.broadcast %cst_20 : f32 to vector<8x32xf32>
    %67 = arith.subf %66, %57 : vector<8x32xf32>
    %cst_21 = arith.constant 1.000000e-10 : f32
    %68 = vector.broadcast %cst_21 : f32 to vector<8x32xf32>
    %69 = arith.addf %67, %68 : vector<8x32xf32>
    %70 = math.log %69 : vector<8x32xf32>
    %cst_22 = arith.constant 0.000000e+00 : f32
    %71 = vector.broadcast %cst_22 : f32 to vector<8x32xf32>
    %72 = arith.subf %71, %70 : vector<8x32xf32>
    %73 = arith.mulf %72, %45 : vector<8x32xf32>
    %cst_23 = arith.constant 1.000000e+00 : f32
    %74 = vector.broadcast %cst_23 : f32 to vector<8x32xf32>
    %75 = arith.subf %74, %45 : vector<8x32xf32>
    %cst_24 = arith.constant dense<0.000000e+00> : vector<8xf32>
    %76 = vector.multi_reduction <add>, %75, %cst_24 [1] : vector<8x32xf32> to vector<8xf32>
    %77 = vector.shape_cast %76 : vector<8xf32> to vector<8x1xf32>
    %cst_25 = arith.constant dense<0.000000e+00> : vector<8xf32>
    %78 = vector.multi_reduction <add>, %45, %cst_25 [1] : vector<8x32xf32> to vector<8xf32>
    %79 = vector.shape_cast %78 : vector<8xf32> to vector<8x1xf32>
    %cst_26 = arith.constant dense<0.000000e+00> : vector<8xf32>
    %80 = vector.multi_reduction <add>, %65, %cst_26 [1] : vector<8x32xf32> to vector<8xf32>
    %81 = vector.shape_cast %80 : vector<8xf32> to vector<8x1xf32>
    %82 = tpu.reciprocal %77 {approx = true} : vector<8x1xf32> -> vector<8x1xf32>
    %83 = arith.mulf %81, %82 : vector<8x1xf32>
    %cst_27 = arith.constant dense<0.000000e+00> : vector<8xf32>
    %84 = vector.multi_reduction <add>, %73, %cst_27 [1] : vector<8x32xf32> to vector<8xf32>
    %85 = vector.shape_cast %84 : vector<8xf32> to vector<8x1xf32>
    %86 = tpu.reciprocal %79 {approx = true} : vector<8x1xf32> -> vector<8x1xf32>
    %87 = arith.mulf %85, %86 : vector<8x1xf32>
    %88 = arith.addf %83, %87 : vector<8x1xf32>
    %c0_28 = arith.constant 0 : index
    %c0_29 = arith.constant 0 : index
    %89 = vector.load %arg5[%c0_28, %c0_29] : memref<8x1xf32, #tpu.memory_space<vmem>>, vector<8x1xf32>
    tpu.vector_store %arg5[%c0_28, %c0_29], %88 {strides = array<i32>} : memref<8x1xf32, #tpu.memory_space<vmem>>, vector<8x1xf32>,
    return
  }
  func.func @transform_0(%arg0: i32) -> (i32, i32) {
    %c0_i32 = arith.constant 0 : i32
    %c0_i32_0 = arith.constant 0 : i32
    return %arg0, %c0_i32 : i32, i32
  }
  func.func @transform_1(%arg0: i32) -> (i32, i32) {
    %c0_i32 = arith.constant 0 : i32
    %c0_i32_0 = arith.constant 0 : i32
    %c0_i32_1 = arith.constant 0 : i32
    return %c0_i32, %c0_i32_0 : i32, i32
  }
  func.func @transform_2(%arg0: i32) -> (i32, i32) {
    %c0_i32 = arith.constant 0 : i32
    %c0_i32_0 = arith.constant 0 : i32
    return %arg0, %c0_i32 : i32, i32
  }
  func.func @transform_3(%arg0: i32) -> (i32, i32) {
    %c0_i32 = arith.constant 0 : i32
    %c0_i32_0 = arith.constant 0 : i32
    %c0_i32_1 = arith.constant 0 : i32
    return %c0_i32, %c0_i32_0 : i32, i32
  }
  func.func @transform_4(%arg0: i32) -> (i32, i32) {
    %c0_i32 = arith.constant 0 : i32
    %c0_i32_0 = arith.constant 0 : i32
    return %arg0, %c0_i32 : i32, i32
  }
}

</mosaic_0001>

<llo_original>
// kernel: tpu_custom_call.1
$region0: #{tpu_custom_call.1}
  #allocation0 [shape = 'u32[]', space=smem, size = 0x4, offset = 0x4, fixed_abs, tag = 'smem constant byte address 0x4 - core index']
  #allocation1 [shape = 'u32[144,128]{1,0:T(1,128)}', space=vmem, size = 0x12000, scoped, tag = 'internal scratch']
  %s0 = inlined_call_operand.vmem [shape: f32[32,32], index: 0, kind: input, shape index: {}]
  %s1 = inlined_call_operand.hbm [shape: f32[32,32], index: 1, kind: input, shape index: {}]
  %s2 = inlined_call_operand.vmem [shape: f32[32,1], index: 2, kind: input, shape index: {}]
  %s3 = inlined_call_operand.vmem [shape: f32[1,32], index: 3, kind: input, shape index: {}]
  %s4 = inlined_call_operand.vmem [shape: f32[32,1], index: 4, kind: output, shape index: {}]
  %s5 = sld [smem:[#allocation0]]
  $region53: #{tpu_custom_call.1} parent=0
    _
  %s7 = ssub.s32 1, %s5
  %s8 = scalar_select 0, %s7, %s5
  $region1: #{tpu_custom_call.1} parent=0
    #allocation2 [shape = 'u8[16384]{0}', space=vmem, size = 0x4000, scoped, tag = 'input window, operand 1, single buffered']
    #allocation3 [shape = 's32[2]{0}', space=sflag, size = 0x8, scoped, tag = 'scoped memory for tpu_custom_call.1']
    %9 = vsyncpa [#allocation3], 0
    loop: start=0, step=1, limit=6
    $region2: #{tpu_custom_call.1} parent=1 // loop_pre_header
      _
    $region3: #{tpu_custom_call.1} parent=1 // loop_header
      %s11 = sphi 0, %s15
      %p12 = scmp.ge.s32.totalorder %s11, 6
      %s21 = sphi 0, %s23
      %s24 = sphi 0, %s21
      %s25 = sphi 0, %s24
      %s41 = sphi 0, %s25
      %s45 = sphi 0, %s45
      %s47 = sphi 0, %s45
      %s48 = sphi 0, %s47
      %s62 = sphi 0, %s48
      %s68 = sphi 0, %s70
      %s71 = sphi 0, %s68
      %s72 = sphi 0, %s71
      %s88 = sphi 0, %s72
      %s92 = sphi 0, %s92
      %s94 = sphi 0, %s92
      %s95 = sphi 0, %s94
      %s109 = sphi 0, %s95
      %s115 = sphi 0, %s117
      %s118 = sphi 0, %s115
      %s119 = sphi 0, %s118
      %s135 = sphi 0, %s119
    $region4: #{tpu_custom_call.1} parent=1 // loop_header_branch
      %14 = sbr.rel (%p12) target = $region8
    $region5: #{tpu_custom_call.1} parent=1 // loop_body
      %s16 = ssub.s32 %s11, 1
      %s17 = ssub.s32 %s11, 2
      %s18 = sadd.s32 %s11, 1
      %s19 = ssub.s32 %s11, %s18
      %p20 = scmp.eq.s32.totalorder %s19, 0
      %s22 = sadd.s32 %s21, 1
      %s23 = scalar_select %p20, %s21, %s22
      %p26 = pneg %p20
      %p27 = scmp.eq.s32.totalorder %s11, 3
      %p28 = por %p26, %p27
      %p29 = scmp.ne.s32.totalorder %s21, %s24
      %p30 = scmp.eq.s32.totalorder %s11, 0
      %p31 = por %p29, %p30
      %p32 = scmp.ne.s32.totalorder %s21, %s24
      %p33 = scmp.eq.s32.totalorder %s16, 3
      %p34 = por %p32, %p33
      %p35 = scmp.ne.s32.totalorder %s24, %s25
      %p36 = scmp.eq.s32.totalorder %s16, 0
      %p37 = por %p35, %p36
      %p38 = scmp.ne.s32.totalorder %s24, %s25
      %p39 = scmp.eq.s32.totalorder %s17, 3
      %p40 = por %p38, %p39
      %p42 = scmp.ne.s32.totalorder %s25, %s41
      %p43 = scmp.eq.s32.totalorder %s17, 0
      %p44 = por %p42, %p43
      %s46 = sadd.s32 %s45, 1
      %p49 = scmp.eq.s32.totalorder %s11, 3
      %p50 = scmp.ne.s32.totalorder %s45, %s47
      %p51 = scmp.eq.s32.totalorder %s11, 0
      %p52 = por %p50, %p51
      %p53 = scmp.ne.s32.totalorder %s45, %s47
      %p54 = scmp.eq.s32.totalorder %s16, 3
      %p55 = por %p53, %p54
      %p56 = scmp.ne.s32.totalorder %s47, %s48
      %p57 = scmp.eq.s32.totalorder %s16, 0
      %p58 = por %p56, %p57
      %p59 = scmp.ne.s32.totalorder %s47, %s48
      %p60 = scmp.eq.s32.totalorder %s17, 3
      %p61 = por %p59, %p60
      %p63 = scmp.ne.s32.totalorder %s48, %s62
      %p64 = scmp.eq.s32.totalorder %s17, 0
      %p65 = por %p63, %p64
      %s66 = ssub.s32 %s11, %s18
      %p67 = scmp.eq.s32.totalorder %s66, 0
      %s69 = sadd.s32 %s68, 1
      %s70 = scalar_select %p67, %s68, %s69
      %p73 = pneg %p67
      %p74 = scmp.eq.s32.totalorder %s11, 3
      %p75 = por %p73, %p74
      %p76 = scmp.ne.s32.totalorder %s68, %s71
      %p77 = scmp.eq.s32.totalorder %s11, 0
      %p78 = por %p76, %p77
      %p79 = scmp.ne.s32.totalorder %s68, %s71
      %p80 = scmp.eq.s32.totalorder %s16, 3
      %p81 = por %p79, %p80
      %p82 = scmp.ne.s32.totalorder %s71, %s72
      %p83 = scmp.eq.s32.totalorder %s16, 0
      %p84 = por %p82, %p83
      %p85 = scmp.ne.s32.totalorder %s71, %s72
      %p86 = scmp.eq.s32.totalorder %s17, 3
      %p87 = por %p85, %p86
      %p89 = scmp.ne.s32.totalorder %s72, %s88
      %p90 = scmp.eq.s32.totalorder %s17, 0
      %p91 = por %p89, %p90
      %s93 = sadd.s32 %s92, 1
      %p96 = scmp.eq.s32.totalorder %s11, 3
      %p97 = scmp.ne.s32.totalorder %s92, %s94
      %p98 = scmp.eq.s32.totalorder %s11, 0
      %p99 = por %p97, %p98
      %p100 = scmp.ne.s32.totalorder %s92, %s94
      %p101 = scmp.eq.s32.totalorder %s16, 3
      %p102 = por %p100, %p101
      %p103 = scmp.ne.s32.totalorder %s94, %s95
      %p104 = scmp.eq.s32.totalorder %s16, 0
      %p105 = por %p103, %p104
      %p106 = scmp.ne.s32.totalorder %s94, %s95
      %p107 = scmp.eq.s32.totalorder %s17, 3
      %p108 = por %p106, %p107
      %p110 = scmp.ne.s32.totalorder %s95, %s109
      %p111 = scmp.eq.s32.totalorder %s17, 0
      %p112 = por %p110, %p111
      %s113 = ssub.s32 %s11, %s18
      %p114 = scmp.eq.s32.totalorder %s113, 0
      %s116 = sadd.s32 %s115, 1
      %s117 = scalar_select %p114, %s115, %s116
      %p120 = pneg %p114
      %p121 = scmp.eq.s32.totalorder %s11, 3
      %p122 = por %p120, %p121
      %p123 = scmp.ne.s32.totalorder %s115, %s118
      %p124 = scmp.eq.s32.totalorder %s11, 0
      %p125 = por %p123, %p124
      %p126 = scmp.ne.s32.totalorder %s115, %s118
      %p127 = scmp.eq.s32.totalorder %s16, 3
      %p128 = por %p126, %p127
      %p129 = scmp.ne.s32.totalorder %s118, %s119
      %p130 = scmp.eq.s32.totalorder %s16, 0
      %p131 = por %p129, %p130
      %p132 = scmp.ne.s32.totalorder %s118, %s119
      %p133 = scmp.eq.s32.totalorder %s17, 3
      %p134 = por %p132, %p133
      %p136 = scmp.ne.s32.totalorder %s119, %s135
      %p137 = scmp.eq.s32.totalorder %s17, 0
      %p138 = por %p136, %p137
      %p139 = scmp.le.s32.totalorder 1, %s11
      %p140 = scmp.lt.s32.totalorder %s11, 5
      %p141 = pnand %p139, %p140
      %p142 = pneg %p141
      // Predicated region
      $region9: #{tpu_custom_call.1} parent=5 // pred_check
        _
      $region10: #{tpu_custom_call.1} parent=5 // pred_check_branch
        %144 = sbr.rel (%p141) target = $region12
      $region11: #{tpu_custom_call.1} parent=5 // pred_region
        %s145 = ssub.s32 %s11, 1
        // Predicated region
        $region13: #{tpu_custom_call.1} parent=11 // pred_check
          %p146 = pneg %p58
        $region14: #{tpu_custom_call.1} parent=11 // pred_check_branch
          %148 = sbr.rel (%p146) target = $region16
        $region15: #{tpu_custom_call.1} parent=11 // pred_region
          %s150 = ssub.s32 512, 512
          %151 = vsyncadd [#allocation3], %s150
          %s152 = sshll.u32 [#allocation2], 4
          %s153 = int_to_ptr.vmem [resolvable:$true] %s152
          %158 = dma.hbm_to_vmem [thread:$0]  %s1, 512, %s153, [#allocation3], 128, 128, 8
        $region16: #{tpu_custom_call.1} parent=11 // pred_fallthru
          _
        // Predicated region
        $region17: #{tpu_custom_call.1} parent=11 // pred_check
          %p159 = pneg %p105
        $region18: #{tpu_custom_call.1} parent=11 // pred_check_branch
          %161 = sbr.rel (%p159) target = $region20
        $region19: #{tpu_custom_call.1} parent=11 // pred_region
          _
        $region20: #{tpu_custom_call.1} parent=11 // pred_fallthru
          _
      $region12: #{tpu_custom_call.1} parent=5 // pred_fallthru
        _
      %p162 = scmp.lt.s32.totalorder %s11, 4
      // Predicated region
      $region21: #{tpu_custom_call.1} parent=5 // pred_check
        %p163 = pneg %p162
      $region22: #{tpu_custom_call.1} parent=5 // pred_check_branch
        %165 = sbr.rel (%p163) target = $region24
      $region23: #{tpu_custom_call.1} parent=5 // pred_region
        // Predicated region
        $region25: #{tpu_custom_call.1} parent=23 // pred_check
          %p166 = pneg %p31
        $region26: #{tpu_custom_call.1} parent=23 // pred_check_branch
          %168 = sbr.rel (%p166) target = $region28
        $region27: #{tpu_custom_call.1} parent=23 // pred_region
          %p169 = scmp.lt.s32.totalorder %s11, 3
          %s170 = scalar_select %p169, %s11, 3
          %s171 = smul.addr %s170, 8
          %s172 = scalar_lea.vmem %s0, %s171
        $region28: #{tpu_custom_call.1} parent=23 // pred_fallthru
          _
        // Predicated region
        $region29: #{tpu_custom_call.1} parent=23 // pred_check
          %p173 = pneg %p78
        $region30: #{tpu_custom_call.1} parent=23 // pred_check_branch
          %175 = sbr.rel (%p173) target = $region32
        $region31: #{tpu_custom_call.1} parent=23 // pred_region
          %p176 = scmp.lt.s32.totalorder %s11, 3
          %s177 = scalar_select %p176, %s11, 3
          %s178 = smul.addr %s177, 8
          %s179 = scalar_lea.vmem %s2, %s178
        $region32: #{tpu_custom_call.1} parent=23 // pred_fallthru
          _
      $region24: #{tpu_custom_call.1} parent=5 // pred_fallthru
        _
      %p180 = scmp.le.s32.totalorder 1, %s11
      %p181 = scmp.lt.s32.totalorder %s11, 5
      %p182 = pnand %p180, %p181
      %p183 = pneg %p182
      // Predicated region
      $region33: #{tpu_custom_call.1} parent=5 // pred_check
        _
      $region34: #{tpu_custom_call.1} parent=5 // pred_check_branch
        %185 = sbr.rel (%p182) target = $region36
      $region35: #{tpu_custom_call.1} parent=5 // pred_region
        %s186 = ssub.s32 %s11, 1
        // Predicated region
        $region37: #{tpu_custom_call.1} parent=35 // pred_check
          %p187 = pneg %p58
        $region38: #{tpu_custom_call.1} parent=35 // pred_check_branch
          %189 = sbr.rel (%p187) target = $region40
        $region39: #{tpu_custom_call.1} parent=35 // pred_region
          %190 = dma.done [#allocation3], 512
        $region40: #{tpu_custom_call.1} parent=35 // pred_fallthru
          _
        %p191 = scmp.lt.s32.totalorder %s16, 3
        %s192 = scalar_select %p191, %s16, 3
        %s193 = smul.addr %s192, 8
        %s194 = scalar_lea.vmem %s0, %s193
        %p195 = pneg %p37
        %p196 = pneg %p34
        %p197 = pneg %p58
        %p198 = pneg %p55
        %p199 = scmp.lt.s32.totalorder %s16, 3
        %s200 = scalar_select %p199, %s16, 3
        %s201 = smul.addr %s200, 8
        %s202 = scalar_lea.vmem %s2, %s201
        %p203 = pneg %p84
        %p204 = pneg %p81
        %p205 = pneg %p105
        %p206 = pneg %p102
        %p207 = pneg %p131
        %p208 = pneg %p128
        %p209 = scmp.lt.s32.totalorder %s16, 3
        %s210 = scalar_select %p209, %s16, 3
        %s211 = smul.addr %s210, 8
        %s212 = scalar_lea.vmem %s4, %s211
        %p213 = scmp.lt.s32.totalorder %s16, 3
        %s214 = scalar_select %p213, %s16, 3
        %s215 = smul.addr %s214, 8
        %s216 = scalar_lea.vmem %s0, %s215
        %p217 = scmp.lt.s32.totalorder %s16, 3
        %s218 = scalar_select %p217, %s16, 3
        %s219 = smul.addr %s218, 8
        %s220 = scalar_lea.vmem %s2, %s219
        %p221 = scmp.lt.s32.totalorder %s16, 3
        %s222 = scalar_select %p221, %s16, 3
        %s223 = smul.addr %s222, 8
        %s224 = scalar_lea.vmem %s4, %s223
        %v226 = vld [vmem:[%s216] sm:$0xff]
        %v227 = vld [vmem:[#allocation2] sm:$0xff]
        %v228 = vld [vmem:[#allocation2 + $0x8] sm:$0xff]
        %v229 = vld [vmem:[#allocation2 + $0x10] sm:$0xff]
        %v230 = vld [vmem:[#allocation2 + $0x18] sm:$0xff]
        %v231 = vld [vmem:[%s220] sm:$0xff]
        %v232 = vld [vmem:[%s3] sm:$0x1]
        %v233 = vmul.f32 %v226, %v226
        %vm234 = vcmask 261120
        %v235 = vsel %vm234, %v233, 0.0
        %236 = vadd.xlane.f32.xlu0 %v235
        %v237 = vpop.xlane.xlu0 %236
        %v238 = vmax.f32 %v237, 1e-24
        %v239 = vrsqrt.pop %v238
        %v240 = vmul.f32 %v227, %v227
        %v241 = vmul.f32 %v228, %v228
        %v242 = vmul.f32 %v229, %v229
        %v243 = vmul.f32 %v230, %v230
        %v244 = vsel %vm234, %v240, 0.0
        %245 = vadd.xlane.f32.xlu0 %v244
        %v246 = vpop.xlane.xlu0 %245
        %v247 = vsel %vm234, %v241, 0.0
        %248 = vadd.xlane.f32.xlu0 %v247
        %v249 = vpop.xlane.xlu0 %248
        %v250 = vsel %vm234, %v242, 0.0
        %251 = vadd.xlane.f32.xlu0 %v250
        %v252 = vpop.xlane.xlu0 %251
        %v253 = vsel %vm234, %v243, 0.0
        %254 = vadd.xlane.f32.xlu0 %v253
        %v255 = vpop.xlane.xlu0 %254
        %v256 = vmax.f32 %v246, 1e-24
        %v257 = vmax.f32 %v249, 1e-24
        %v258 = vmax.f32 %v252, 1e-24
        %v259 = vmax.f32 %v255, 1e-24
        %v260 = vrsqrt.pop %v256
        %v261 = vrsqrt.pop %v257
        %v262 = vrsqrt.pop %v258
        %v263 = vrsqrt.pop %v259
        %v264 = vmul.f32 %v226, %v239
        %v265 = vmul.f32 %v227, %v260
        %v266 = vmul.f32 %v228, %v261
        %v267 = vmul.f32 %v229, %v262
        %v268 = vmul.f32 %v230, %v263
        %v269 = vpack.c.bf16 %v264, %v264
        %v270 = vpack.c.bf16 %v266, %v265
        %v271 = vpack.c.bf16 %v268, %v267
        %v273 = vsel %vm234, %v269, 0
        %v276 = vsel %vm234, %v270, 0
        %v279 = vsel %vm234, %v271, 0
        %281 = vmatprep.subr.bf16.mxu0 0
        %282 = vmatpush1.bf16.xpose.msra.mxu0 0
        %283 = vmatprep.subr.bf16.mxu0 0
        %284 = vmatpush1.bf16.xpose.msra.mxu0 0
        %285 = vmatprep.subr.bf16.mxu0 0
        %286 = vmatpush1.bf16.xpose.msra.mxu0 0
        %287 = vmatprep.subr.bf16.mxu0 0
        %288 = vmatpush1.bf16.xpose.msra.mxu0 0
        %289 = vmatprep.subr.bf16.mxu0 0
        %290 = vmatpush1.bf16.xpose.msra.mxu0 0
        %291 = vmatprep.subr.bf16.mxu0 0
        %292 = vmatpush1.bf16.xpose.msra.mxu0 0
        %293 = vmatprep.subr.bf16.mxu0 0
        %294 = vmatpush1.bf16.xpose.msra.mxu0 %v279
        %295 = vmatprep.subr.bf16.mxu0 0
        %296 = vmatpush1.bf16.xpose.msra.mxu0 %v276
        %297 = vmatprep.subr.bf16.mxu0 0
        %298 = vmatpush2.bf16.xpose.msra.mxu0 0
        %299 = vmatprep.subr.bf16.mxu0 0
        %300 = vmatpush2.bf16.xpose.msra.mxu0 0
        %301 = vmatprep.subr.bf16.mxu0 0
        %302 = vmatpush2.bf16.xpose.msra.mxu0 0
        %303 = vmatprep.subr.bf16.mxu0 0
        %304 = vmatpush2.bf16.xpose.msra.mxu0 0
        %305 = vmatprep.subr.bf16.mxu0 0
        %306 = vmatpush2.bf16.xpose.msra.mxu0 0
        %307 = vmatprep.subr.bf16.mxu0 0
        %308 = vmatpush2.bf16.xpose.msra.mxu0 0
        %309 = vmatprep.subr.bf16.mxu0 0
        %310 = vmatpush2.bf16.xpose.msra.mxu0 0
        %311 = vmatprep.subr.bf16.mxu0 0
        %312 = vmatpush2.bf16.xpose.msra.mxu0 0
        %313 = vmatprep.mubr.bf16.mxu0 0
        %314 = vmatmul.mubr.bf16.gmra.mxu0 %v273
        %v315 = vpop.f32.mrf.mxu0
        %v316 = vadd.f32 0.0, %v315
        %v317 = vpop.f32.mrf.mxu0
        %v318 = vpop.f32.mrf.mxu0
        %v319 = vpop.f32.mrf.mxu0
        %320 = vdwg.mxu0
        %322 = vset.pattern.permute.xlu0 0
        %323 = vperm.xlu0 %322, %v231
        %v324 = vpop.permute.xlu0 %323
        %v327 = vlaneseq
        %v328 = vshrl.u32 %v327, 7
        %v329 = vsub.s32 0, %v328
        %v330 = vrot.slane %v232, %v329
        %v332 = vsub.f32 %v324, %v330
        %v333 = vand.u32 2147483647, %v332
        %vm334 = vcmp.gt.f32.partialorder %v333, 0.1
        %vm335 = vcmp.lt.f32.partialorder %v231, 0.0
        %v336 = vsel %vm335, 1, 0
        %v337 = vcvt.s32.f32 %v336
        %vm338 = vcmp.lt.f32.partialorder %v232, 0.0
        %v339 = vsel %vm338, 1, 0
        %v340 = vcvt.s32.f32 %v339
        %342 = vset.pattern.permute.xlu0 0
        %343 = vperm.xlu0 %342, %v337
        %v344 = vpop.permute.xlu0 %343
        %v347 = vlaneseq
        %v348 = vshrl.u32 %v347, 7
        %v349 = vsub.s32 0, %v348
        %v350 = vrot.slane %v340, %v349
        %v352 = vsub.f32 %v344, %v350
        %v353 = vand.u32 2147483647, %v352
        %vm354 = vcmp.gt.f32.partialorder %v353, 0.0
        %vm355 = vmor %vm334, %vm354
        %v356 = vsel %vm355, 1, 0
        %v357 = vcvt.s32.f32 %v356
        %v358 = vsel %vm234, %v316, -inf
        %359 = vmax.xlane.f32.xlu0 %v358
        %v360 = vpop.xlane.xlu0 %359
        %v361 = vsub.f32 %v316, %v360
        %v362 = vmul.f32 %v361, 1.442695
        %v363 = vpow.pop %v362
        %v364 = vsel %vm234, %v363, 0.0
        %365 = vadd.xlane.f32.xlu0 %v364
        %v366 = vpop.xlane.xlu0 %365
        %v367 = vrcp.pop %v366
        %v368 = vmul.f32 %v363, %v367
        %v369 = vlog2.pop %v366
        %v370 = vmul.f32 %v369, 0.6931472
        %v371 = vsub.f32 %v370, %v361
        %v372 = vmin.f32 %v371, 23.02585
        %v373 = vsub.f32 1.0, %v357
        %v374 = vmul.f32 %v372, %v373
        %v375 = vsub.f32 1.0, %v368
        %v376 = vadd.f32 %v375, 1e-10
        %v377 = vlog2.pop %v376
        %v378 = vmul.f32 %v377, 0.6931472
        %v379 = vsub.f32 0.0, %v378
        %v380 = vmul.f32 %v379, %v357
        %v381 = vsel %vm234, %v373, 0.0
        %382 = vadd.xlane.f32.xlu0 %v381
        %v383 = vpop.xlane.xlu0 %382
        %v384 = vsel %vm234, %v357, 0.0
        %385 = vadd.xlane.f32.xlu0 %v384
        %v386 = vpop.xlane.xlu0 %385
        %v387 = vsel %vm234, %v374, 0.0
        %388 = vadd.xlane.f32.xlu0 %v387
        %v389 = vpop.xlane.xlu0 %388
        %v390 = vrcp.pop %v383
        %v391 = vmul.f32 %v389, %v390
        %v392 = vsel %vm234, %v380, 0.0
        %393 = vadd.xlane.f32.xlu0 %v392
        %v394 = vpop.xlane.xlu0 %393
        %v395 = vrcp.pop %v386
        %v396 = vmul.f32 %v394, %v395
        %v397 = vadd.f32 %v391, %v396
        %vm398 = vcmask 7168
        %399 = vst.msk [vmem:[%s224] sm:$0xff] %vm398, %v397
        %p400 = scmp.lt.s32.totalorder %s16, 3
        %s401 = scalar_select %p400, %s16, 3
        %s402 = smul.addr %s401, 8
        %s403 = scalar_lea.vmem %s4, %s402
        // Predicated region
        $region41: #{tpu_custom_call.1} parent=35 // pred_check
          %p404 = pneg %p128
        $region42: #{tpu_custom_call.1} parent=35 // pred_check_branch
          %406 = sbr.rel (%p404) target = $region44
        $region43: #{tpu_custom_call.1} parent=35 // pred_region
          _
        $region44: #{tpu_custom_call.1} parent=35 // pred_fallthru
          _
      $region36: #{tpu_custom_call.1} parent=5 // pred_fallthru
        _
      %p407 = scmp.le.s32.totalorder 2, %s11
      // Predicated region
      $region45: #{tpu_custom_call.1} parent=5 // pred_check
        %p408 = pneg %p407
      $region46: #{tpu_custom_call.1} parent=5 // pred_check_branch
        %410 = sbr.rel (%p408) target = $region48
      $region47: #{tpu_custom_call.1} parent=5 // pred_region
        %s411 = ssub.s32 %s11, 2
        // Predicated region
        $region49: #{tpu_custom_call.1} parent=47 // pred_check
          %p412 = pneg %p134
        $region50: #{tpu_custom_call.1} parent=47 // pred_check_branch
          %414 = sbr.rel (%p412) target = $region52
        $region51: #{tpu_custom_call.1} parent=47 // pred_region
          %p415 = scmp.lt.s32.totalorder %s17, 3
          %s416 = scalar_select %p415, %s17, 3
          %s417 = smul.addr %s416, 8
          %s418 = scalar_lea.vmem %s4, %s417
        $region52: #{tpu_custom_call.1} parent=47 // pred_fallthru
          _
      $region48: #{tpu_custom_call.1} parent=5 // pred_fallthru
        _
    $region6: #{tpu_custom_call.1} parent=1 // loop_footer
      %s15 = sadd.s32 1, %s11
    $region7: #{tpu_custom_call.1} parent=1 // loop_footer_branch
      %10 = sbr.rel target = $region3
    $region8: #{tpu_custom_call.1} parent=1 // loop_exit
      _
    %419 = vsyncpa [#allocation3], 1
    %s420 = scalar_lea.sflag [#allocation3], 1
    %421 = vsyncpa %s420, 1

</llo_original>
